<compile_context>
chip_gen: v5e
topology: v5e:2x2
jax: 0.10.0
libtpu: 0.0.40
codegen_flags: <defaults>
</compile_context>

<pallas_src>
import jax
import jax.numpy as jnp
from jax.experimental import pallas as pl
from jax.experimental.pallas import tpu as pltpu


def _skeleton_kernel(x_ref, w_ref, o_ref):
    # x_ref: (tile, K)   w_ref: (K, Nout)   o_ref: (tile, Nout)
    # Single MXU push with f32 accumulation; output is written lane-contiguous
    # in the final flattened layout (no separate permute pass anywhere).
    o_ref[...] = jnp.dot(
        x_ref[...], w_ref[...], preferred_element_type=jnp.float32
    ).astype(o_ref.dtype)


def _round_up(v, m):
    return ((v + m - 1) // m) * m


def _pack_factor(timesteps, dtype):
    """How many frames to fold into one lane-dense row."""
    try:
        kind = jax.devices()[0].device_kind.lower()
    except Exception:
        kind = ""
    # v5's MXU is much weaker (especially in f32); the block-diagonal packed
    # weight inflates MXU FLOPs by ~k*C, which could flip v5e compute-bound,
    # so skip the packing there for >=32-bit inputs (bf16 stays BW-bound).
    if "v5" in kind and jnp.dtype(dtype).itemsize >= 4:
        return 1
    for k in (8, 4, 2):
        if timesteps % k == 0:
            return k
    return 1


def pack_skeleton_weight(W, kpts_dim, pack):
    """Expand the (N, M) weight into the fused, lane-dense (k*N*C, k*M*C) form.

    W_big[n*C+c, m*C+c'] = W[n, m] * (c == c');  W_pack = kron(I_k, W_big).
    For inference with a static W, hoist this out of the per-call path.
    """
    C = kpts_dim
    w_big = jnp.kron(W, jnp.eye(C, dtype=W.dtype))            # (N*C, M*C)
    if pack > 1:
        w_big = jnp.kron(jnp.eye(pack, dtype=W.dtype), w_big)  # block-diagonal
    return w_big


def skeleton_transformer(x, W, timesteps, kpts_dim, output_dim):
    """x: (T, N*C), W: (N, M) -> (T, M*C), matching the PyTorch module."""
    T, C, M = timesteps, kpts_dim, output_dim
    N = W.shape[0]
    assert x.shape == (T, N * C)

    k = _pack_factor(T, x.dtype)
    w_pack = pack_skeleton_weight(W, C, k)                    # (k*N*C, k*M*C)
    rows = T // k
    lanes_in = k * N * C
    lanes_out = k * M * C
    x_pack = x.reshape(rows, lanes_in)                        # free row-major reshape

    # --- T tiling -------------------------------------------------------------
    # Per-step DMA traffic must be well above the ~0.35us fixed grid-step cost,
    # and 2x(in) + 2x(out) + 1x(weight) buffers must fit v5e's 16 MiB scoped
    # VMEM default (and v7x's 64 MiB physical).  8192 frames/step ~= 4.7 MB i/o.
    min_tile = max(8, 512 // k)                               # >= ~0.3 MB / step
    max_tile = max(8, 8192 // k)                              # VMEM-derived cap
    if rows <= min_tile:
        tile = rows                                           # single full block
    else:
        tile = _round_up(pl.cdiv(rows, 8), 8)                 # aim ~8 steps (v7x 2 TCs)
        tile = max(min_tile, min(max_tile, tile))             # always a multiple of 8
    grid = (pl.cdiv(rows, tile),)

    itemsize = jnp.dtype(x.dtype).itemsize
    w_bytes = lanes_in * lanes_out * jnp.dtype(w_pack.dtype).itemsize
    vmem_need = 2 * tile * (lanes_in + lanes_out) * itemsize + w_bytes
    vmem_limit = int(min(48 << 20, max(32 << 20, 2 * vmem_need)))

    cost = pl.CostEstimate(
        flops=2 * T * N * M * C,              # logical flops: tiny -> BW-bound op
        transcendentals=0,
        bytes_accessed=T * (N * C + M * C) * itemsize + w_bytes,
    )

    y_pack = pl.pallas_call(
        _skeleton_kernel,
        out_shape=jax.ShapeDtypeStruct((rows, lanes_out), x.dtype),
        grid=grid,
        in_specs=[
            pl.BlockSpec((tile, lanes_in), lambda i: (i, 0)),
            # Constant index_map + single buffer: weight is DMA'd once and stays
            # VMEM-resident across all T tiles (no redundant second buffer).
            pl.BlockSpec((lanes_in, lanes_out), lambda i: (0, 0),
                         pipeline_mode=pl.Buffered(1)),
        ],
        out_specs=pl.BlockSpec((tile, lanes_out), lambda i: (i, 0)),
        compiler_params=pltpu.CompilerParams(
            dimension_semantics=("parallel",),
            vmem_limit_bytes=vmem_limit,
        ),
        cost_estimate=cost,
    )(x_pack, w_pack)

    # Note: if the surrounding model tolerates bf16 activations, cast x and the
    # out_shape to bf16 here (f32 accumulation is kept in the dot) for ~2x less
    # HBM traffic on this purely bandwidth-bound op.
    return y_pack.reshape(T, M * C)


def _xavier_uniform(key, shape, dtype=jnp.float32):
    fan_in, fan_out = shape
    bound = (6.0 / (fan_in + fan_out)) ** 0.5
    return jax.random.uniform(key, shape, dtype=dtype, minval=-bound, maxval=bound)


if __name__ == "__main__":
    # Small, module-consistent shapes: T frames, C coord dims, N joints, M output joints.
    timesteps = 64       # T (multiple of 8 so the lane-dense k=8 frame packing engages)
    kpts_dim = 3         # C
    input_kpts_num = 16  # N
    output_dim = 32      # M

    key = jax.random.PRNGKey(0)
    kx, kw = jax.random.split(key)

    x = jax.random.normal(kx, (timesteps, input_kpts_num * kpts_dim), dtype=jnp.float32)
    W = _xavier_uniform(kw, (input_kpts_num, output_dim), dtype=jnp.float32)

    out = skeleton_transformer(x, W, timesteps, kpts_dim, output_dim)
    out = jax.block_until_ready(out)

    # Pure-JAX reference mirroring the PyTorch forward exactly.
    ref = x.reshape(timesteps, -1, kpts_dim)
    ref = jnp.transpose(ref, (0, 2, 1))
    ref = jnp.matmul(ref, W)
    ref = jnp.transpose(ref, (0, 2, 1))
    ref = ref.reshape(timesteps, output_dim * kpts_dim)

    assert out.shape == (timesteps, output_dim * kpts_dim)
    assert jnp.allclose(out, ref, atol=1e-5, rtol=1e-5)

    print("KERNEL_OK")
</pallas_src>

<mosaic_0001>
module attributes {stable_mosaic.version = 11 : i64} {
  func.func @_skeleton_kernel(%arg0: i32, %arg1: memref<8x384xf32, #tpu.memory_space<vmem>>, %arg2: memref<384x768xf32, #tpu.memory_space<vmem>>, %arg3: memref<8x768xf32, #tpu.memory_space<vmem>>) attributes {dimension_semantics = [#tpu.dimension_semantics<parallel>], iteration_bounds = array<i64: 1>, scalar_prefetch = 0 : i64, scratch_operands = 0 : i64, tpu.core_type = #tpu.core_type<tc>, window_params = [{transform_indices = @transform_0, window_bounds = array<i64: 8, 384>}, {pipeline_mode = #tpu.pipeline_mode<synchronous>, transform_indices = @transform_1, window_bounds = array<i64: 384, 768>}, {transform_indices = @transform_2, window_bounds = array<i64: 8, 768>}]} {
    %c0 = arith.constant 0 : index
    %c0_0 = arith.constant 0 : index
    %0 = vector.load %arg1[%c0, %c0_0] : memref<8x384xf32, #tpu.memory_space<vmem>>, vector<8x384xf32>
    %c0_1 = arith.constant 0 : index
    %c0_2 = arith.constant 0 : index
    %1 = vector.load %arg2[%c0_1, %c0_2] : memref<384x768xf32, #tpu.memory_space<vmem>>, vector<384x768xf32>
    %cst = arith.constant dense<0.000000e+00> : vector<8x768xf32>
    %2 = tpu.matmul %0, %1, %cst {dimension_numbers = #tpu.dot_dimension_numbers<[1], [0], [0], [1], [0, 0, 1, 1], [], []>} : vector<8x384xf32>, vector<384x768xf32>, vector<8x768xf32> -> vector<8x768xf32>
    %c0_3 = arith.constant 0 : index
    %c0_4 = arith.constant 0 : index
    %3 = vector.load %arg3[%c0_3, %c0_4] : memref<8x768xf32, #tpu.memory_space<vmem>>, vector<8x768xf32>
    tpu.vector_store %arg3[%c0_3, %c0_4], %2 {strides = array<i32>} : memref<8x768xf32, #tpu.memory_space<vmem>>, vector<8x768xf32>,
    return
  }
  func.func @transform_0(%arg0: i32) -> (i32, i32) {
    %c0_i32 = arith.constant 0 : i32
    %c0_i32_0 = arith.constant 0 : i32
    return %arg0, %c0_i32 : i32, i32
  }
  func.func @transform_1(%arg0: i32) -> (i32, i32) {
    %c0_i32 = arith.constant 0 : i32
    %c0_i32_0 = arith.constant 0 : i32
    %c0_i32_1 = arith.constant 0 : i32
    return %c0_i32, %c0_i32_0 : i32, i32
  }
  func.func @transform_2(%arg0: i32) -> (i32, i32) {
    %c0_i32 = arith.constant 0 : i32
    %c0_i32_0 = arith.constant 0 : i32
    return %arg0, %c0_i32 : i32, i32
  }
}

</mosaic_0001>

<llo_original>
// kernel: tpu_custom_call.1
$region0: #{tpu_custom_call.1}
  #allocation0 [shape = 'u32[]', space=smem, size = 0x4, offset = 0x4, fixed_abs, tag = 'smem constant byte address 0x4 - core index']
  #allocation1 [shape = 'u32[72,128]{1,0:T(1,128)}', space=vmem, size = 0x9000, scoped, tag = 'internal scratch']
  %s0 = inlined_call_operand.hbm [shape: f32[8,384], index: 0, kind: input, shape index: {}]
  %s1 = inlined_call_operand.hbm [shape: f32[384,768], index: 1, kind: input, shape index: {}]
  %s2 = inlined_call_operand.hbm [shape: f32[8,768], index: 2, kind: output, shape index: {}]
  %s3 = sld [smem:[#allocation0]]
  $region26: #{tpu_custom_call.1} parent=0
    _
  %s5 = ssub.s32 1, %s3
  %s6 = scalar_select 0, %s5, %s3
  $region1: #{tpu_custom_call.1} parent=0
    #allocation2 [shape = 'u8[12288]{0}', space=vmem, size = 0x3000, scoped, tag = 'input window, operand 0, single buffered']
    #allocation3 [shape = 's32[1]{0}', space=sflag, size = 0x4, scoped, tag = 'scoped memory for tpu_custom_call.1']
    #allocation4 [shape = 's32[1]{0}', space=sflag, size = 0x4, scoped, tag = 'scoped memory for tpu_custom_call.1']
    #allocation5 [shape = 'u8[1179648]{0}', space=vmem, size = 0x120000, scoped, tag = 'input window, operand 1, single buffered']
    #allocation6 [shape = 's32[1]{0}', space=sflag, size = 0x4, scoped, tag = 'scoped memory for tpu_custom_call.1']
    #allocation7 [shape = 'u8[24576]{0}', space=vmem, size = 0x6000, scoped, tag = 'output window, operand 0, single buffered']
    %7 = vsyncpa [#allocation3], 0
    %8 = vsyncpa [#allocation6], 0
    %9 = vsyncpa [#allocation4], 0
    // Predicated region
    $region2: #{tpu_custom_call.1} parent=1 // pred_check
      _
    $region3: #{tpu_custom_call.1} parent=1 // pred_check_branch
      %11 = sbr.rel (0) target = $region5
    $region4: #{tpu_custom_call.1} parent=1 // pred_region
      %13 = vsyncadd [#allocation3], 0
      %s15 = sshll.u32 %s0, 4
      %s16 = int_to_ptr.hbm [resolvable:$true] %s15
      %s17 = sshll.u32 [#allocation2], 4
      %s18 = int_to_ptr.vmem [resolvable:$true] %s17
      %20 = dma.hbm_to_vmem [thread:$0]  %s16, 384, %s18, [#allocation3]
    $region5: #{tpu_custom_call.1} parent=1 // pred_fallthru
      _
    // Predicated region
    $region6: #{tpu_custom_call.1} parent=1 // pred_check
      _
    $region7: #{tpu_custom_call.1} parent=1 // pred_check_branch
      %22 = sbr.rel (0) target = $region9
    $region8: #{tpu_custom_call.1} parent=1 // pred_region
      %24 = vsyncadd [#allocation6], 0
      %s25 = sshll.u32 %s1, 4
      %s26 = int_to_ptr.hbm [resolvable:$true] %s25
      %s27 = sshll.u32 [#allocation5], 4
      %s28 = int_to_ptr.vmem [resolvable:$true] %s27
      %33 = dma.hbm_to_vmem [thread:$0]  %s26, 36864, %s28, [#allocation6], 768, 768, 48
    $region9: #{tpu_custom_call.1} parent=1 // pred_fallthru
      _
    // Predicated region
    $region10: #{tpu_custom_call.1} parent=1 // pred_check
      _
    $region11: #{tpu_custom_call.1} parent=1 // pred_check_branch
      %35 = sbr.rel (0) target = $region13
    $region12: #{tpu_custom_call.1} parent=1 // pred_region
      %37 = dma.done [#allocation3], 384
    $region13: #{tpu_custom_call.1} parent=1 // pred_fallthru
      _
    // Predicated region
    $region14: #{tpu_custom_call.1} parent=1 // pred_check
      _
    $region15: #{tpu_custom_call.1} parent=1 // pred_check_branch
      %39 = sbr.rel (0) target = $region17
    $region16: #{tpu_custom_call.1} parent=1 // pred_region
      %41 = dma.done [#allocation6], 36864
    $region17: #{tpu_custom_call.1} parent=1 // pred_fallthru
      _
    %v42 = vld [vmem:[#allocation2] sm:$0xff]
    %v43 = vld [vmem:[#allocation2 + $0x8] sm:$0xff]
    %v44 = vld [vmem:[#allocation2 + $0x10] sm:$0xff]
    %v45 = vld [vmem:[#allocation5] sm:$0xff]
    %v46 = vld [vmem:[#allocation5 + $0x8] sm:$0xff]
    %v47 = vld [vmem:[#allocation5 + $0x10] sm:$0xff]
    %v48 = vld [vmem:[#allocation5 + $0x18] sm:$0xff]
    %v49 = vld [vmem:[#allocation5 + $0x20] sm:$0xff]
    %v50 = vld [vmem:[#allocation5 + $0x28] sm:$0xff]
    %v51 = vld [vmem:[#allocation5 + $0x30] sm:$0xff]
    %v52 = vld [vmem:[#allocation5 + $0x38] sm:$0xff]
    %v53 = vld [vmem:[#allocation5 + $0x40] sm:$0xff]
    %v54 = vld [vmem:[#allocation5 + $0x48] sm:$0xff]
    %v55 = vld [vmem:[#allocation5 + $0x50] sm:$0xff]
    %v56 = vld [vmem:[#allocation5 + $0x58] sm:$0xff]
    %v57 = vld [vmem:[#allocation5 + $0x60] sm:$0xff]
    %v58 = vld [vmem:[#allocation5 + $0x68] sm:$0xff]
    %v59 = vld [vmem:[#allocation5 + $0x70] sm:$0xff]
    %v60 = vld [vmem:[#allocation5 + $0x78] sm:$0xff]
    %v61 = vld [vmem:[#allocation5 + $0x80] sm:$0xff]
    %v62 = vld [vmem:[#allocation5 + $0x88] sm:$0xff]
    %v63 = vld [vmem:[#allocation5 + $0x90] sm:$0xff]
    %v64 = vld [vmem:[#allocation5 + $0x98] sm:$0xff]
    %v65 = vld [vmem:[#allocation5 + $0xa0] sm:$0xff]
    %v66 = vld [vmem:[#allocation5 + $0xa8] sm:$0xff]
    %v67 = vld [vmem:[#allocation5 + $0xb0] sm:$0xff]
    %v68 = vld [vmem:[#allocation5 + $0xb8] sm:$0xff]
    %v69 = vld [vmem:[#allocation5 + $0xc0] sm:$0xff]
    %v70 = vld [vmem:[#allocation5 + $0xc8] sm:$0xff]
    %v71 = vld [vmem:[#allocation5 + $0xd0] sm:$0xff]
    %v72 = vld [vmem:[#allocation5 + $0xd8] sm:$0xff]
    %v73 = vld [vmem:[#allocation5 + $0xe0] sm:$0xff]
    %v74 = vld [vmem:[#allocation5 + $0xe8] sm:$0xff]
    %v75 = vld [vmem:[#allocation5 + $0xf0] sm:$0xff]
    %v76 = vld [vmem:[#allocation5 + $0xf8] sm:$0xff]
    %v77 = vld [vmem:[#allocation5 + $0x100] sm:$0xff]
    %v78 = vld [vmem:[#allocation5 + $0x108] sm:$0xff]
    %v79 = vld [vmem:[#allocation5 + $0x110] sm:$0xff]
    %v80 = vld [vmem:[#allocation5 + $0x118] sm:$0xff]
    %v81 = vld [vmem:[#allocation5 + $0x120] sm:$0xff]
    %v82 = vld [vmem:[#allocation5 + $0x128] sm:$0xff]
    %v83 = vld [vmem:[#allocation5 + $0x130] sm:$0xff]
    %v84 = vld [vmem:[#allocation5 + $0x138] sm:$0xff]
    %v85 = vld [vmem:[#allocation5 + $0x140] sm:$0xff]
    %v86 = vld [vmem:[#allocation5 + $0x148] sm:$0xff]
    %v87 = vld [vmem:[#allocation5 + $0x150] sm:$0xff]
    %v88 = vld [vmem:[#allocation5 + $0x158] sm:$0xff]
    %v89 = vld [vmem:[#allocation5 + $0x160] sm:$0xff]
    %v90 = vld [vmem:[#allocation5 + $0x168] sm:$0xff]
    %v91 = vld [vmem:[#allocation5 + $0x170] sm:$0xff]
    %v92 = vld [vmem:[#allocation5 + $0x178] sm:$0xff]
    %v93 = vld [vmem:[#allocation5 + $0x180] sm:$0xff]
    %v94 = vld [vmem:[#allocation5 + $0x188] sm:$0xff]
    %v95 = vld [vmem:[#allocation5 + $0x190] sm:$0xff]
    %v96 = vld [vmem:[#allocation5 + $0x198] sm:$0xff]
    %v97 = vld [vmem:[#allocation5 + $0x1a0] sm:$0xff]
    %v98 = vld [vmem:[#allocation5 + $0x1a8] sm:$0xff]
    %v99 = vld [vmem:[#allocation5 + $0x1b0] sm:$0xff]
    %v100 = vld [vmem:[#allocation5 + $0x1b8] sm:$0xff]
    %v101 = vld [vmem:[#allocation5 + $0x1c0] sm:$0xff]
    %v102 = vld [vmem:[#allocation5 + $0x1c8] sm:$0xff]
    %v103 = vld [vmem:[#allocation5 + $0x1d0] sm:$0xff]
    %v104 = vld [vmem:[#allocation5 + $0x1d8] sm:$0xff]
    %v105 = vld [vmem:[#allocation5 + $0x1e0] sm:$0xff]
    %v106 = vld [vmem:[#allocation5 + $0x1e8] sm:$0xff]
    %v107 = vld [vmem:[#allocation5 + $0x1f0] sm:$0xff]
    %v108 = vld [vmem:[#allocation5 + $0x1f8] sm:$0xff]
    %v109 = vld [vmem:[#allocation5 + $0x200] sm:$0xff]
    %v110 = vld [vmem:[#allocation5 + $0x208] sm:$0xff]
    %v111 = vld [vmem:[#allocation5 + $0x210] sm:$0xff]
    %v112 = vld [vmem:[#allocation5 + $0x218] sm:$0xff]
    %v113 = vld [vmem:[#allocation5 + $0x220] sm:$0xff]
    %v114 = vld [vmem:[#allocation5 + $0x228] sm:$0xff]
    %v115 = vld [vmem:[#allocation5 + $0x230] sm:$0xff]
    %v116 = vld [vmem:[#allocation5 + $0x238] sm:$0xff]
    %v117 = vld [vmem:[#allocation5 + $0x240] sm:$0xff]
    %v118 = vld [vmem:[#allocation5 + $0x248] sm:$0xff]
    %v119 = vld [vmem:[#allocation5 + $0x250] sm:$0xff]
    %v120 = vld [vmem:[#allocation5 + $0x258] sm:$0xff]
    %v121 = vld [vmem:[#allocation5 + $0x260] sm:$0xff]
    %v122 = vld [vmem:[#allocation5 + $0x268] sm:$0xff]
    %v123 = vld [vmem:[#allocation5 + $0x270] sm:$0xff]
    %v124 = vld [vmem:[#allocation5 + $0x278] sm:$0xff]
    %v125 = vld [vmem:[#allocation5 + $0x280] sm:$0xff]
    %v126 = vld [vmem:[#allocation5 + $0x288] sm:$0xff]
    %v127 = vld [vmem:[#allocation5 + $0x290] sm:$0xff]
    %v128 = vld [vmem:[#allocation5 + $0x298] sm:$0xff]
    %v129 = vld [vmem:[#allocation5 + $0x2a0] sm:$0xff]
    %v130 = vld [vmem:[#allocation5 + $0x2a8] sm:$0xff]
    %v131 = vld [vmem:[#allocation5 + $0x2b0] sm:$0xff]
    %v132 = vld [vmem:[#allocation5 + $0x2b8] sm:$0xff]
    %v133 = vld [vmem:[#allocation5 + $0x2c0] sm:$0xff]
    %v134 = vld [vmem:[#allocation5 + $0x2c8] sm:$0xff]
    %v135 = vld [vmem:[#allocation5 + $0x2d0] sm:$0xff]
    %v136 = vld [vmem:[#allocation5 + $0x2d8] sm:$0xff]
    %v137 = vld [vmem:[#allocation5 + $0x2e0] sm:$0xff]
    %v138 = vld [vmem:[#allocation5 + $0x2e8] sm:$0xff]
    %v139 = vld [vmem:[#allocation5 + $0x2f0] sm:$0xff]
    %v140 = vld [vmem:[#allocation5 + $0x2f8] sm:$0xff]
    %v141 = vld [vmem:[#allocation5 + $0x300] sm:$0xff]
    %v142 = vld [vmem:[#allocation5 + $0x308] sm:$0xff]
    %v143 = vld [vmem:[#allocation5 + $0x310] sm:$0xff]
    %v144 = vld [vmem:[#allocation5 + $0x318] sm:$0xff]
    %v145 = vld [vmem:[#allocation5 + $0x320] sm:$0xff]
    %v146 = vld [vmem:[#allocation5 + $0x328] sm:$0xff]
    %v147 = vld [vmem:[#allocation5 + $0x330] sm:$0xff]
    %v148 = vld [vmem:[#allocation5 + $0x338] sm:$0xff]
    %v149 = vld [vmem:[#allocation5 + $0x340] sm:$0xff]
    %v150 = vld [vmem:[#allocation5 + $0x348] sm:$0xff]
    %v151 = vld [vmem:[#allocation5 + $0x350] sm:$0xff]
    %v152 = vld [vmem:[#allocation5 + $0x358] sm:$0xff]
    %v153 = vld [vmem:[#allocation5 + $0x360] sm:$0xff]
    %v154 = vld [vmem:[#allocation5 + $0x368] sm:$0xff]
    %v155 = vld [vmem:[#allocation5 + $0x370] sm:$0xff]
    %v156 = vld [vmem:[#allocation5 + $0x378] sm:$0xff]
    %v157 = vld [vmem:[#allocation5 + $0x380] sm:$0xff]
    %v158 = vld [vmem:[#allocation5 + $0x388] sm:$0xff]
    %v159 = vld [vmem:[#allocation5 + $0x390] sm:$0xff]
    %v160 = vld [vmem:[#allocation5 + $0x398] sm:$0xff]
    %v161 = vld [vmem:[#allocation5 + $0x3a0] sm:$0xff]
    %v162 = vld [vmem:[#allocation5 + $0x3a8] sm:$0xff]
    %v163 = vld [vmem:[#allocation5 + $0x3b0] sm:$0xff]
    %v164 = vld [vmem:[#allocation5 + $0x3b8] sm:$0xff]
    %v165 = vld [vmem:[#allocation5 + $0x3c0] sm:$0xff]
    %v166 = vld [vmem:[#allocation5 + $0x3c8] sm:$0xff]
    %v167 = vld [vmem:[#allocation5 + $0x3d0] sm:$0xff]
    %v168 = vld [vmem:[#allocation5 + $0x3d8] sm:$0xff]
    %v169 = vld [vmem:[#allocation5 + $0x3e0] sm:$0xff]
    %v170 = vld [vmem:[#allocation5 + $0x3e8] sm:$0xff]
    %v171 = vld [vmem:[#allocation5 + $0x3f0] sm:$0xff]
    %v172 = vld [vmem:[#allocation5 + $0x3f8] sm:$0xff]
    %v173 = vld [vmem:[#allocation5 + $0x400] sm:$0xff]
    %v174 = vld [vmem:[#allocation5 + $0x408] sm:$0xff]
    %v175 = vld [vmem:[#allocation5 + $0x410] sm:$0xff]
    %v176 = vld [vmem:[#allocation5 + $0x418] sm:$0xff]
    %v177 = vld [vmem:[#allocation5 + $0x420] sm:$0xff]
    %v178 = vld [vmem:[#allocation5 + $0x428] sm:$0xff]
    %v179 = vld [vmem:[#allocation5 + $0x430] sm:$0xff]
    %v180 = vld [vmem:[#allocation5 + $0x438] sm:$0xff]
    %v181 = vld [vmem:[#allocation5 + $0x440] sm:$0xff]
    %v182 = vld [vmem:[#allocation5 + $0x448] sm:$0xff]
    %v183 = vld [vmem:[#allocation5 + $0x450] sm:$0xff]
    %v184 = vld [vmem:[#allocation5 + $0x458] sm:$0xff]
    %v185 = vld [vmem:[#allocation5 + $0x460] sm:$0xff]
    %v186 = vld [vmem:[#allocation5 + $0x468] sm:$0xff]
    %v187 = vld [vmem:[#allocation5 + $0x470] sm:$0xff]
    %v188 = vld [vmem:[#allocation5 + $0x478] sm:$0xff]
    %v189 = vld [vmem:[#allocation5 + $0x480] sm:$0xff]
    %v190 = vld [vmem:[#allocation5 + $0x488] sm:$0xff]
    %v191 = vld [vmem:[#allocation5 + $0x490] sm:$0xff]
    %v192 = vld [vmem:[#allocation5 + $0x498] sm:$0xff]
    %v193 = vld [vmem:[#allocation5 + $0x4a0] sm:$0xff]
    %v194 = vld [vmem:[#allocation5 + $0x4a8] sm:$0xff]
    %v195 = vld [vmem:[#allocation5 + $0x4b0] sm:$0xff]
    %v196 = vld [vmem:[#allocation5 + $0x4b8] sm:$0xff]
    %v197 = vld [vmem:[#allocation5 + $0x4c0] sm:$0xff]
    %v198 = vld [vmem:[#allocation5 + $0x4c8] sm:$0xff]
    %v199 = vld [vmem:[#allocation5 + $0x4d0] sm:$0xff]
    %v200 = vld [vmem:[#allocation5 + $0x4d8] sm:$0xff]
    %v201 = vld [vmem:[#allocation5 + $0x4e0] sm:$0xff]
    %v202 = vld [vmem:[#allocation5 + $0x4e8] sm:$0xff]
    %v203 = vld [vmem:[#allocation5 + $0x4f0] sm:$0xff]
    %v204 = vld [vmem:[#allocation5 + $0x4f8] sm:$0xff]
    %v205 = vld [vmem:[#allocation5 + $0x500] sm:$0xff]
    %v206 = vld [vmem:[#allocation5 + $0x508] sm:$0xff]
    %v207 = vld [vmem:[#allocation5 + $0x510] sm:$0xff]
    %v208 = vld [vmem:[#allocation5 + $0x518] sm:$0xff]
    %v209 = vld [vmem:[#allocation5 + $0x520] sm:$0xff]
    %v210 = vld [vmem:[#allocation5 + $0x528] sm:$0xff]
    %v211 = vld [vmem:[#allocation5 + $0x530] sm:$0xff]
    %v212 = vld [vmem:[#allocation5 + $0x538] sm:$0xff]
    %v213 = vld [vmem:[#allocation5 + $0x540] sm:$0xff]
    %v214 = vld [vmem:[#allocation5 + $0x548] sm:$0xff]
    %v215 = vld [vmem:[#allocation5 + $0x550] sm:$0xff]
    %v216 = vld [vmem:[#allocation5 + $0x558] sm:$0xff]
    %v217 = vld [vmem:[#allocation5 + $0x560] sm:$0xff]
    %v218 = vld [vmem:[#allocation5 + $0x568] sm:$0xff]
    %v219 = vld [vmem:[#allocation5 + $0x570] sm:$0xff]
    %v220 = vld [vmem:[#allocation5 + $0x578] sm:$0xff]
    %v221 = vld [vmem:[#allocation5 + $0x580] sm:$0xff]
    %v222 = vld [vmem:[#allocation5 + $0x588] sm:$0xff]
    %v223 = vld [vmem:[#allocation5 + $0x590] sm:$0xff]
    %v224 = vld [vmem:[#allocation5 + $0x598] sm:$0xff]
    %v225 = vld [vmem:[#allocation5 + $0x5a0] sm:$0xff]
    %v226 = vld [vmem:[#allocation5 + $0x5a8] sm:$0xff]
    %v227 = vld [vmem:[#allocation5 + $0x5b0] sm:$0xff]
    %v228 = vld [vmem:[#allocation5 + $0x5b8] sm:$0xff]
    %v229 = vld [vmem:[#allocation5 + $0x5c0] sm:$0xff]
    %v230 = vld [vmem:[#allocation5 + $0x5c8] sm:$0xff]
    %v231 = vld [vmem:[#allocation5 + $0x5d0] sm:$0xff]
    %v232 = vld [vmem:[#allocation5 + $0x5d8] sm:$0xff]
    %v233 = vld [vmem:[#allocation5 + $0x5e0] sm:$0xff]
    %v234 = vld [vmem:[#allocation5 + $0x5e8] sm:$0xff]
    %v235 = vld [vmem:[#allocation5 + $0x5f0] sm:$0xff]
    %v236 = vld [vmem:[#allocation5 + $0x5f8] sm:$0xff]
    %v237 = vld [vmem:[#allocation5 + $0x600] sm:$0xff]
    %v238 = vld [vmem:[#allocation5 + $0x608] sm:$0xff]
    %v239 = vld [vmem:[#allocation5 + $0x610] sm:$0xff]
    %v240 = vld [vmem:[#allocation5 + $0x618] sm:$0xff]
    %v241 = vld [vmem:[#allocation5 + $0x620] sm:$0xff]
    %v242 = vld [vmem:[#allocation5 + $0x628] sm:$0xff]
    %v243 = vld [vmem:[#allocation5 + $0x630] sm:$0xff]
    %v244 = vld [vmem:[#allocation5 + $0x638] sm:$0xff]
    %v245 = vld [vmem:[#allocation5 + $0x640] sm:$0xff]
    %v246 = vld [vmem:[#allocation5 + $0x648] sm:$0xff]
    %v247 = vld [vmem:[#allocation5 + $0x650] sm:$0xff]
    %v248 = vld [vmem:[#allocation5 + $0x658] sm:$0xff]
    %v249 = vld [vmem:[#allocation5 + $0x660] sm:$0xff]
    %v250 = vld [vmem:[#allocation5 + $0x668] sm:$0xff]
    %v251 = vld [vmem:[#allocation5 + $0x670] sm:$0xff]
    %v252 = vld [vmem:[#allocation5 + $0x678] sm:$0xff]
    %v253 = vld [vmem:[#allocation5 + $0x680] sm:$0xff]
    %v254 = vld [vmem:[#allocation5 + $0x688] sm:$0xff]
    %v255 = vld [vmem:[#allocation5 + $0x690] sm:$0xff]
    %v256 = vld [vmem:[#allocation5 + $0x698] sm:$0xff]
    %v257 = vld [vmem:[#allocation5 + $0x6a0] sm:$0xff]
    %v258 = vld [vmem:[#allocation5 + $0x6a8] sm:$0xff]
    %v259 = vld [vmem:[#allocation5 + $0x6b0] sm:$0xff]
    %v260 = vld [vmem:[#allocation5 + $0x6b8] sm:$0xff]
    %v261 = vld [vmem:[#allocation5 + $0x6c0] sm:$0xff]
    %v262 = vld [vmem:[#allocation5 + $0x6c8] sm:$0xff]
    %v263 = vld [vmem:[#allocation5 + $0x6d0] sm:$0xff]
    %v264 = vld [vmem:[#allocation5 + $0x6d8] sm:$0xff]
    %v265 = vld [vmem:[#allocation5 + $0x6e0] sm:$0xff]
    %v266 = vld [vmem:[#allocation5 + $0x6e8] sm:$0xff]
    %v267 = vld [vmem:[#allocation5 + $0x6f0] sm:$0xff]
    %v268 = vld [vmem:[#allocation5 + $0x6f8] sm:$0xff]
    %v269 = vld [vmem:[#allocation5 + $0x700] sm:$0xff]
    %v270 = vld [vmem:[#allocation5 + $0x708] sm:$0xff]
    %v271 = vld [vmem:[#allocation5 + $0x710] sm:$0xff]
    %v272 = vld [vmem:[#allocation5 + $0x718] sm:$0xff]
    %v273 = vld [vmem:[#allocation5 + $0x720] sm:$0xff]
    %v274 = vld [vmem:[#allocation5 + $0x728] sm:$0xff]
    %v275 = vld [vmem:[#allocation5 + $0x730] sm:$0xff]
    %v276 = vld [vmem:[#allocation5 + $0x738] sm:$0xff]
    %v277 = vld [vmem:[#allocation5 + $0x740] sm:$0xff]
    %v278 = vld [vmem:[#allocation5 + $0x748] sm:$0xff]
    %v279 = vld [vmem:[#allocation5 + $0x750] sm:$0xff]
    %v280 = vld [vmem:[#allocation5 + $0x758] sm:$0xff]
    %v281 = vld [vmem:[#allocation5 + $0x760] sm:$0xff]
    %v282 = vld [vmem:[#allocation5 + $0x768] sm:$0xff]
    %v283 = vld [vmem:[#allocation5 + $0x770] sm:$0xff]
    %v284 = vld [vmem:[#allocation5 + $0x778] sm:$0xff]
    %v285 = vld [vmem:[#allocation5 + $0x780] sm:$0xff]
    %v286 = vld [vmem:[#allocation5 + $0x788] sm:$0xff]
    %v287 = vld [vmem:[#allocation5 + $0x790] sm:$0xff]
    %v288 = vld [vmem:[#allocation5 + $0x798] sm:$0xff]
    %v289 = vld [vmem:[#allocation5 + $0x7a0] sm:$0xff]
    %v290 = vld [vmem:[#allocation5 + $0x7a8] sm:$0xff]
    %v291 = vld [vmem:[#allocation5 + $0x7b0] sm:$0xff]
    %v292 = vld [vmem:[#allocation5 + $0x7b8] sm:$0xff]
    %v293 = vld [vmem:[#allocation5 + $0x7c0] sm:$0xff]
    %v294 = vld [vmem:[#allocation5 + $0x7c8] sm:$0xff]
    %v295 = vld [vmem:[#allocation5 + $0x7d0] sm:$0xff]
    %v296 = vld [vmem:[#allocation5 + $0x7d8] sm:$0xff]
    %v297 = vld [vmem:[#allocation5 + $0x7e0] sm:$0xff]
    %v298 = vld [vmem:[#allocation5 + $0x7e8] sm:$0xff]
    %v299 = vld [vmem:[#allocation5 + $0x7f0] sm:$0xff]
    %v300 = vld [vmem:[#allocation5 + $0x7f8] sm:$0xff]
    %v301 = vld [vmem:[#allocation5 + $0x800] sm:$0xff]
    %v302 = vld [vmem:[#allocation5 + $0x808] sm:$0xff]
    %v303 = vld [vmem:[#allocation5 + $0x810] sm:$0xff]
    %v304 = vld [vmem:[#allocation5 + $0x818] sm:$0xff]
    %v305 = vld [vmem:[#allocation5 + $0x820] sm:$0xff]
    %v306 = vld [vmem:[#allocation5 + $0x828] sm:$0xff]
    %v307 = vld [vmem:[#allocation5 + $0x830] sm:$0xff]
    %v308 = vld [vmem:[#allocation5 + $0x838] sm:$0xff]
    %v309 = vld [vmem:[#allocation5 + $0x840] sm:$0xff]
    %v310 = vld [vmem:[#allocation5 + $0x848] sm:$0xff]
    %v311 = vld [vmem:[#allocation5 + $0x850] sm:$0xff]
    %v312 = vld [vmem:[#allocation5 + $0x858] sm:$0xff]
    %v313 = vld [vmem:[#allocation5 + $0x860] sm:$0xff]
    %v314 = vld [vmem:[#allocation5 + $0x868] sm:$0xff]
    %v315 = vld [vmem:[#allocation5 + $0x870] sm:$0xff]
    %v316 = vld [vmem:[#allocation5 + $0x878] sm:$0xff]
    %v317 = vld [vmem:[#allocation5 + $0x880] sm:$0xff]
    %v318 = vld [vmem:[#allocation5 + $0x888] sm:$0xff]
    %v319 = vld [vmem:[#allocation5 + $0x890] sm:$0xff]
    %v320 = vld [vmem:[#allocation5 + $0x898] sm:$0xff]
    %v321 = vld [vmem:[#allocation5 + $0x8a0] sm:$0xff]
    %v322 = vld [vmem:[#allocation5 + $0x8a8] sm:$0xff]
    %v323 = vld [vmem:[#allocation5 + $0x8b0] sm:$0xff]
    %v324 = vld [vmem:[#allocation5 + $0x8b8] sm:$0xff]
    %v325 = vld [vmem:[#allocation5 + $0x8c0] sm:$0xff]
    %v326 = vld [vmem:[#allocation5 + $0x8c8] sm:$0xff]
    %v327 = vld [vmem:[#allocation5 + $0x8d0] sm:$0xff]
    %v328 = vld [vmem:[#allocation5 + $0x8d8] sm:$0xff]
    %v329 = vld [vmem:[#allocation5 + $0x8e0] sm:$0xff]
    %v330 = vld [vmem:[#allocation5 + $0x8e8] sm:$0xff]
    %v331 = vld [vmem:[#allocation5 + $0x8f0] sm:$0xff]
    %v332 = vld [vmem:[#allocation5 + $0x8f8] sm:$0xff]
    %333 = vmatpush.msra.mxu0 %v135
    %334 = vmatpush.msra.mxu0 %v129
    %335 = vmatpush.msra.mxu0 %v123
    %336 = vmatpush.msra.mxu0 %v117
    %337 = vmatpush.msra.mxu0 %v111
    %338 = vmatpush.msra.mxu0 %v105
    %339 = vmatpush.msra.mxu0 %v99
    %340 = vmatpush.msra.mxu0 %v93
    %341 = vmatpush.msra.mxu0 %v87
    %342 = vmatpush.msra.mxu0 %v81
    %343 = vmatpush.msra.mxu0 %v75
    %344 = vmatpush.msra.mxu0 %v69
    %345 = vmatpush.msra.mxu0 %v63
    %346 = vmatpush.msra.mxu0 %v57
    %347 = vmatpush.msra.mxu0 %v51
    %348 = vmatpush.msra.mxu0 %v45
    %349 = vmatmul.f32.gmra.mxu0 %v42
    %v350 = vpop.f32.mrf.mxu0
    %v351 = vadd.f32 0.0, %v350
    %352 = vdwg.mxu0
    %353 = vmatpush.msra.mxu0 %v231
    %354 = vmatpush.msra.mxu0 %v225
    %355 = vmatpush.msra.mxu0 %v219
    %356 = vmatpush.msra.mxu0 %v213
    %357 = vmatpush.msra.mxu0 %v207
    %358 = vmatpush.msra.mxu0 %v201
    %359 = vmatpush.msra.mxu0 %v195
    %360 = vmatpush.msra.mxu0 %v189
    %361 = vmatpush.msra.mxu0 %v183
    %362 = vmatpush.msra.mxu0 %v177
    %363 = vmatpush.msra.mxu0 %v171
    %364 = vmatpush.msra.mxu0 %v165
    %365 = vmatpush.msra.mxu0 %v159
    %366 = vmatpush.msra.mxu0 %v153
    %367 = vmatpush.msra.mxu0 %v147
    %368 = vmatpush.msra.mxu0 %v141
    %369 = vmatmul.f32.gmra.mxu0 %v43
    %v370 = vpop.f32.mrf.mxu0
    %v371 = vadd.f32 %v351, %v370
    %372 = vdwg.mxu0
    %373 = vmatpush.msra.mxu0 %v327
    %374 = vmatpush.msra.mxu0 %v321
    %375 = vmatpush.msra.mxu0 %v315
    %376 = vmatpush.msra.mxu0 %v309
    %377 = vmatpush.msra.mxu0 %v303
    %378 = vmatpush.msra.mxu0 %v297
    %379 = vmatpush.msra.mxu0 %v291
    %380 = vmatpush.msra.mxu0 %v285
    %381 = vmatpush.msra.mxu0 %v279
    %382 = vmatpush.msra.mxu0 %v273
    %383 = vmatpush.msra.mxu0 %v267
    %384 = vmatpush.msra.mxu0 %v261
    %385 = vmatpush.msra.mxu0 %v255
    %386 = vmatpush.msra.mxu0 %v249
    %387 = vmatpush.msra.mxu0 %v243
    %388 = vmatpush.msra.mxu0 %v237
    %389 = vmatmul.f32.gmra.mxu0 %v44
    %v390 = vpop.f32.mrf.mxu0
    %v391 = vadd.f32 %v371, %v390
    %392 = vdwg.mxu0
    %393 = vmatpush.msra.mxu0 %v136
    %394 = vmatpush.msra.mxu0 %v130
    %395 = vmatpush.msra.mxu0 %v124
    %396 = vmatpush.msra.mxu0 %v118
    %397 = vmatpush.msra.mxu0 %v112
    %398 = vmatpush.msra.mxu0 %v106
    %399 = vmatpush.msra.mxu0 %v100
    %400 = vmatpush.msra.mxu0 %v94
    %401 = vmatpush.msra.mxu0 %v88
    %402 = vmatpush.msra.mxu0 %v82
    %403 = vmatpush.msra.mxu0 %v76
    %404 = vmatpush.msra.mxu0 %v70
    %405 = vmatpush.msra.mxu0 %v64
    %406 = vmatpush.msra.mxu0 %v58
    %407 = vmatpush.msra.mxu0 %v52
    %408 = vmatpush.msra.mxu0 %v46
    %409 = vmatmul.f32.gmra.mxu0 %v42
    %v410 = vpop.f32.mrf.mxu0
    %v411 = vadd.f32 0.0, %v410
    %412 = vdwg.mxu0
    %413 = vmatpush.msra.mxu0 %v232
    %414 = vmatpush.msra.mxu0 %v226
    %415 = vmatpush.msra.mxu0 %v220
    %416 = vmatpush.msra.mxu0 %v214
    %417 = vmatpush.msra.mxu0 %v208
    %418 = vmatpush.msra.mxu0 %v202
    %419 = vmatpush.msra.mxu0 %v196
    %420 = vmatpush.msra.mxu0 %v190
    %421 = vmatpush.msra.mxu0 %v184
    %422 = vmatpush.msra.mxu0 %v178
    %423 = vmatpush.msra.mxu0 %v172
    %424 = vmatpush.msra.mxu0 %v166
    %425 = vmatpush.msra.mxu0 %v160
    %426 = vmatpush.msra.mxu0 %v154
    %427 = vmatpush.msra.mxu0 %v148
    %428 = vmatpush.msra.mxu0 %v142
    %429 = vmatmul.f32.gmra.mxu0 %v43
    %v430 = vpop.f32.mrf.mxu0
    %v431 = vadd.f32 %v411, %v430
    %432 = vdwg.mxu0
    %433 = vmatpush.msra.mxu0 %v328
    %434 = vmatpush.msra.mxu0 %v322
    %435 = vmatpush.msra.mxu0 %v316
    %436 = vmatpush.msra.mxu0 %v310
    %437 = vmatpush.msra.mxu0 %v304
    %438 = vmatpush.msra.mxu0 %v298
    %439 = vmatpush.msra.mxu0 %v292
    %440 = vmatpush.msra.mxu0 %v286
    %441 = vmatpush.msra.mxu0 %v280
    %442 = vmatpush.msra.mxu0 %v274
    %443 = vmatpush.msra.mxu0 %v268
    %444 = vmatpush.msra.mxu0 %v262
    %445 = vmatpush.msra.mxu0 %v256
    %446 = vmatpush.msra.mxu0 %v250
    %447 = vmatpush.msra.mxu0 %v244
    %448 = vmatpush.msra.mxu0 %v238
    %449 = vmatmul.f32.gmra.mxu0 %v44
    %v450 = vpop.f32.mrf.mxu0
    %v451 = vadd.f32 %v431, %v450
    %452 = vdwg.mxu0
    %453 = vmatpush.msra.mxu0 %v137
    %454 = vmatpush.msra.mxu0 %v131
    %455 = vmatpush.msra.mxu0 %v125
    %456 = vmatpush.msra.mxu0 %v119
    %457 = vmatpush.msra.mxu0 %v113
    %458 = vmatpush.msra.mxu0 %v107
    %459 = vmatpush.msra.mxu0 %v101
    %460 = vmatpush.msra.mxu0 %v95
    %461 = vmatpush.msra.mxu0 %v89
    %462 = vmatpush.msra.mxu0 %v83
    %463 = vmatpush.msra.mxu0 %v77
    %464 = vmatpush.msra.mxu0 %v71
    %465 = vmatpush.msra.mxu0 %v65
    %466 = vmatpush.msra.mxu0 %v59
    %467 = vmatpush.msra.mxu0 %v53
    %468 = vmatpush.msra.mxu0 %v47
    %469 = vmatmul.f32.gmra.mxu0 %v42
    %v470 = vpop.f32.mrf.mxu0
    %v471 = vadd.f32 0.0, %v470
    %472 = vdwg.mxu0
    %473 = vmatpush.msra.mxu0 %v233
    %474 = vmatpush.msra.mxu0 %v227
    %475 = vmatpush.msra.mxu0 %v221
    %476 = vmatpush.msra.mxu0 %v215
    %477 = vmatpush.msra.mxu0 %v209
    %478 = vmatpush.msra.mxu0 %v203
    %479 = vmatpush.msra.mxu0 %v197
    %480 = vmatpush.msra.mxu0 %v191
    %481 = vmatpush.msra.mxu0 %v185
    %482 = vmatpush.msra.mxu0 %v179
    %483 = vmatpush.msra.mxu0 %v173
    %484 = vmatpush.msra.mxu0 %v167
    %485 = vmatpush.msra.mxu0 %v161
    %486 = vmatpush.msra.mxu0 %v155
    %487 = vmatpush.msra.mxu0 %v149
    %488 = vmatpush.msra.mxu0 %v143
    %489 = vmatmul.f32.gmra.mxu0 %v43
    %v490 = vpop.f32.mrf.mxu0
    %v491 = vadd.f32 %v471, %v490
    %492 = vdwg.mxu0
    %493 = vmatpush.msra.mxu0 %v329
    %494 = vmatpush.msra.mxu0 %v323
    %495 = vmatpush.msra.mxu0 %v317
    %496 = vmatpush.msra.mxu0 %v311
    %497 = vmatpush.msra.mxu0 %v305
    %498 = vmatpush.msra.mxu0 %v299
    %499 = vmatpush.msra.mxu0 %v293
    %500 = vmatpush.msra.mxu0 %v287
    %501 = vmatpush.msra.mxu0 %v281
    %502 = vmatpush.msra.mxu0 %v275
    %503 = vmatpush.msra.mxu0 %v269
    %504 = vmatpush.msra.mxu0 %v263
    %505 = vmatpush.msra.mxu0 %v257
    %506 = vmatpush.msra.mxu0 %v251
    %507 = vmatpush.msra.mxu0 %v245
    %508 = vmatpush.msra.mxu0 %v239
    %509 = vmatmul.f32.gmra.mxu0 %v44
    %v510 = vpop.f32.mrf.mxu0
    %v511 = vadd.f32 %v491, %v510
    %512 = vdwg.mxu0
    %513 = vmatpush.msra.mxu0 %v138
    %514 = vmatpush.msra.mxu0 %v132
    %515 = vmatpush.msra.mxu0 %v126
    %516 = vmatpush.msra.mxu0 %v120
    %517 = vmatpush.msra.mxu0 %v114
    %518 = vmatpush.msra.mxu0 %v108
    %519 = vmatpush.msra.mxu0 %v102
    %520 = vmatpush.msra.mxu0 %v96
    %521 = vmatpush.msra.mxu0 %v90
    %522 = vmatpush.msra.mxu0 %v84
    %523 = vmatpush.msra.mxu0 %v78
    %524 = vmatpush.msra.mxu0 %v72
    %525 = vmatpush.msra.mxu0 %v66
    %526 = vmatpush.msra.mxu0 %v60
    %527 = vmatpush.msra.mxu0 %v54
    %528 = vmatpush.msra.mxu0 %v48
    %529 = vmatmul.f32.gmra.mxu0 %v42
    %v530 = vpop.f32.mrf.mxu0
    %v531 = vadd.f32 0.0, %v530
    %532 = vdwg.mxu0
    %533 = vmatpush.msra.mxu0 %v234
    %534 = vmatpush.msra.mxu0 %v228
    %535 = vmatpush.msra.mxu0 %v222
    %536 = vmatpush.msra.mxu0 %v216
    %537 = vmatpush.msra.mxu0 %v210
    %538 = vmatpush.msra.mxu0 %v204
    %539 = vmatpush.msra.mxu0 %v198
    %540 = vmatpush.msra.mxu0 %v192
    %541 = vmatpush.msra.mxu0 %v186
    %542 = vmatpush.msra.mxu0 %v180
    %543 = vmatpush.msra.mxu0 %v174
    %544 = vmatpush.msra.mxu0 %v168
    %545 = vmatpush.msra.mxu0 %v162
    %546 = vmatpush.msra.mxu0 %v156
    %547 = vmatpush.msra.mxu0 %v150
    %548 = vmatpush.msra.mxu0 %v144
    %549 = vmatmul.f32.gmra.mxu0 %v43
    %v550 = vpop.f32.mrf.mxu0
    %v551 = vadd.f32 %v531, %v550
    %552 = vdwg.mxu0
    %553 = vmatpush.msra.mxu0 %v330
    %554 = vmatpush.msra.mxu0 %v324
    %555 = vmatpush.msra.mxu0 %v318
    %556 = vmatpush.msra.mxu0 %v312
    %557 = vmatpush.msra.mxu0 %v306
    %558 = vmatpush.msra.mxu0 %v300
    %559 = vmatpush.msra.mxu0 %v294
    %560 = vmatpush.msra.mxu0 %v288
    %561 = vmatpush.msra.mxu0 %v282
    %562 = vmatpush.msra.mxu0 %v276
    %563 = vmatpush.msra.mxu0 %v270
    %564 = vmatpush.msra.mxu0 %v264
    %565 = vmatpush.msra.mxu0 %v258
    %566 = vmatpush.msra.mxu0 %v252
    %567 = vmatpush.msra.mxu0 %v246
    %568 = vmatpush.msra.mxu0 %v240
    %569 = vmatmul.f32.gmra.mxu0 %v44
    %v570 = vpop.f32.mrf.mxu0
    %v571 = vadd.f32 %v551, %v570
    %572 = vdwg.mxu0
    %573 = vmatpush.msra.mxu0 %v139
    %574 = vmatpush.msra.mxu0 %v133
    %575 = vmatpush.msra.mxu0 %v127
    %576 = vmatpush.msra.mxu0 %v121
    %577 = vmatpush.msra.mxu0 %v115
    %578 = vmatpush.msra.mxu0 %v109
    %579 = vmatpush.msra.mxu0 %v103
    %580 = vmatpush.msra.mxu0 %v97
    %581 = vmatpush.msra.mxu0 %v91
    %582 = vmatpush.msra.mxu0 %v85
    %583 = vmatpush.msra.mxu0 %v79
    %584 = vmatpush.msra.mxu0 %v73
    %585 = vmatpush.msra.mxu0 %v67
    %586 = vmatpush.msra.mxu0 %v61
    %587 = vmatpush.msra.mxu0 %v55
    %588 = vmatpush.msra.mxu0 %v49
    %589 = vmatmul.f32.gmra.mxu0 %v42
    %v590 = vpop.f32.mrf.mxu0
    %v591 = vadd.f32 0.0, %v590
    %592 = vdwg.mxu0
    %593 = vmatpush.msra.mxu0 %v235
    %594 = vmatpush.msra.mxu0 %v229
    %595 = vmatpush.msra.mxu0 %v223
    %596 = vmatpush.msra.mxu0 %v217
    %597 = vmatpush.msra.mxu0 %v211
    %598 = vmatpush.msra.mxu0 %v205
    %599 = vmatpush.msra.mxu0 %v199
    %600 = vmatpush.msra.mxu0 %v193
    %601 = vmatpush.msra.mxu0 %v187
    %602 = vmatpush.msra.mxu0 %v181
    %603 = vmatpush.msra.mxu0 %v175
    %604 = vmatpush.msra.mxu0 %v169
    %605 = vmatpush.msra.mxu0 %v163
    %606 = vmatpush.msra.mxu0 %v157
    %607 = vmatpush.msra.mxu0 %v151
    %608 = vmatpush.msra.mxu0 %v145
    %609 = vmatmul.f32.gmra.mxu0 %v43
    %v610 = vpop.f32.mrf.mxu0
    %v611 = vadd.f32 %v591, %v610
    %612 = vdwg.mxu0
    %613 = vmatpush.msra.mxu0 %v331
    %614 = vmatpush.msra.mxu0 %v325
    %615 = vmatpush.msra.mxu0 %v319
    %616 = vmatpush.msra.mxu0 %v313
    %617 = vmatpush.msra.mxu0 %v307
    %618 = vmatpush.msra.mxu0 %v301
    %619 = vmatpush.msra.mxu0 %v295
    %620 = vmatpush.msra.mxu0 %v289
    %621 = vmatpush.msra.mxu0 %v283
    %622 = vmatpush.msra.mxu0 %v277
    %623 = vmatpush.msra.mxu0 %v271
    %624 = vmatpush.msra.mxu0 %v265
    %625 = vmatpush.msra.mxu0 %v259
    %626 = vmatpush.msra.mxu0 %v253
    %627 = vmatpush.msra.mxu0 %v247
    %628 = vmatpush.msra.mxu0 %v241
    %629 = vmatmul.f32.gmra.mxu0 %v44
    %v630 = vpop.f32.mrf.mxu0
    %v631 = vadd.f32 %v611, %v630
    %632 = vdwg.mxu0
    %633 = vmatpush.msra.mxu0 %v140
    %634 = vmatpush.msra.mxu0 %v134
    %635 = vmatpush.msra.mxu0 %v128
    %636 = vmatpush.msra.mxu0 %v122
    %637 = vmatpush.msra.mxu0 %v116
    %638 = vmatpush.msra.mxu0 %v110
    %639 = vmatpush.msra.mxu0 %v104
    %640 = vmatpush.msra.mxu0 %v98
    %641 = vmatpush.msra.mxu0 %v92
    %642 = vmatpush.msra.mxu0 %v86
    %643 = vmatpush.msra.mxu0 %v80
    %644 = vmatpush.msra.mxu0 %v74
    %645 = vmatpush.msra.mxu0 %v68
    %646 = vmatpush.msra.mxu0 %v62
    %647 = vmatpush.msra.mxu0 %v56
    %648 = vmatpush.msra.mxu0 %v50
    %649 = vmatmul.f32.gmra.mxu0 %v42
    %v650 = vpop.f32.mrf.mxu0
    %v651 = vadd.f32 0.0, %v650
    %652 = vdwg.mxu0
    %653 = vmatpush.msra.mxu0 %v236
    %654 = vmatpush.msra.mxu0 %v230
    %655 = vmatpush.msra.mxu0 %v224
    %656 = vmatpush.msra.mxu0 %v218
    %657 = vmatpush.msra.mxu0 %v212
    %658 = vmatpush.msra.mxu0 %v206
    %659 = vmatpush.msra.mxu0 %v200
    %660 = vmatpush.msra.mxu0 %v194
    %661 = vmatpush.msra.mxu0 %v188
    %662 = vmatpush.msra.mxu0 %v182
    %663 = vmatpush.msra.mxu0 %v176
    %664 = vmatpush.msra.mxu0 %v170
    %665 = vmatpush.msra.mxu0 %v164
    %666 = vmatpush.msra.mxu0 %v158
    %667 = vmatpush.msra.mxu0 %v152
    %668 = vmatpush.msra.mxu0 %v146
    %669 = vmatmul.f32.gmra.mxu0 %v43
    %v670 = vpop.f32.mrf.mxu0
    %v671 = vadd.f32 %v651, %v670
    %672 = vdwg.mxu0
    %673 = vmatpush.msra.mxu0 %v332
    %674 = vmatpush.msra.mxu0 %v326
    %675 = vmatpush.msra.mxu0 %v320
    %676 = vmatpush.msra.mxu0 %v314
    %677 = vmatpush.msra.mxu0 %v308
    %678 = vmatpush.msra.mxu0 %v302
    %679 = vmatpush.msra.mxu0 %v296
    %680 = vmatpush.msra.mxu0 %v290
    %681 = vmatpush.msra.mxu0 %v284
    %682 = vmatpush.msra.mxu0 %v278
    %683 = vmatpush.msra.mxu0 %v272
    %684 = vmatpush.msra.mxu0 %v266
    %685 = vmatpush.msra.mxu0 %v260
    %686 = vmatpush.msra.mxu0 %v254
    %687 = vmatpush.msra.mxu0 %v248
    %688 = vmatpush.msra.mxu0 %v242
    %689 = vmatmul.f32.gmra.mxu0 %v44
    %v690 = vpop.f32.mrf.mxu0
    %v691 = vadd.f32 %v671, %v690
    %692 = vdwg.mxu0
    %693 = vst [vmem:[#allocation7] sm:$0xff] %v391
    %694 = vst [vmem:[#allocation7 + $0x8] sm:$0xff] %v451
    %695 = vst [vmem:[#allocation7 + $0x10] sm:$0xff] %v511
    %696 = vst [vmem:[#allocation7 + $0x18] sm:$0xff] %v571
    %697 = vst [vmem:[#allocation7 + $0x20] sm:$0xff] %v631
    %698 = vst [vmem:[#allocation7 + $0x28] sm:$0xff] %v691
    // Predicated region
    $region18: #{tpu_custom_call.1} parent=1 // pred_check
      _
    $region19: #{tpu_custom_call.1} parent=1 // pred_check_branch
      %700 = sbr.rel (0) target = $region21
    $region20: #{tpu_custom_call.1} parent=1 // pred_region
      %702 = vsyncadd [#allocation4], 0
      %s704 = sshll.u32 [#allocation7], 4
      %s705 = int_to_ptr.vmem [resolvable:$true] %s704
      %s706 = sshll.u32 %s2, 4
      %s707 = int_to_ptr.hbm [resolvable:$true] %s706
      %709 = dma.vmem_to_hbm [thread:$0]  %s705, 768, %s707, [#allocation4]
    $region21: #{tpu_custom_call.1} parent=1 // pred_fallthru
      _
    // Predicated region
    $region22: #{tpu_custom_call.1} parent=1 // pred_check
      _
    $region23: #{tpu_custom_call.1} parent=1 // pred_check_branch
      %711 = sbr.rel (0) target = $region25
    $region24: #{tpu_custom_call.1} parent=1 // pred_region
      %713 = dma.done [#allocation4], 768
    $region25: #{tpu_custom_call.1} parent=1 // pred_fallthru
      _
    %714 = vsyncpa [#allocation3], 1
    %715 = vsyncpa [#allocation6], 1
    %716 = vsyncpa [#allocation4], 1

</llo_original>
